<compile_context>
chip_gen: v7x
topology: tpu7x:2x2x1
jax: 0.10.0
libtpu: 0.0.40
codegen_flags: <defaults>
</compile_context>

<pallas_src>
import math

import jax
import jax.numpy as jnp
from jax.experimental import pallas as pl
from jax.experimental.pallas import tpu as pltpu


def _round_up(x, m):
    return (x + m - 1) // m * m


# Conservative on-chip working-set budget that double-buffers on every
# generation once vmem_limit_bytes is raised explicitly
# (v5e/v6e: 128 MiB physical VMEM, v7x: 64 MiB).
_VMEM_BUDGET = 40 * 1024 * 1024


def lstm_cell_kernel(xh_ref, cx_ref, w_ref, b_ref, hy_ref, cy_ref):
    """One (hidden-tile, batch-tile) step of the LSTM cell.

    xh_ref : (tb, Kp)        fused [x | hx] activations (mm_dtype)
    cx_ref : (tb, tn)        cell-state tile
    w_ref  : (1, Kp, 4*tn)   fused [Wx; Wh], gate-interleaved per hidden tile
    b_ref  : (1, 1, 4*tn)    fused bias (f32), gate-interleaved per hidden tile
    hy_ref : (tb, tn)
    cy_ref : (tb, tn)
    """
    tn = hy_ref.shape[1]

    # Single fused MXU matmul with f32 accumulation; bias added once to the
    # accumulated gates tile.
    gates = jnp.dot(xh_ref[...], w_ref[0], preferred_element_type=jnp.float32)
    gates = gates + b_ref[0]

    # Gate slices are lane-aligned: tn is a multiple of 128.
    ingate     = jax.nn.sigmoid(gates[:, 0 * tn:1 * tn])
    forgetgate = jax.nn.sigmoid(gates[:, 1 * tn:2 * tn])
    cellgate   = jnp.tanh(gates[:, 2 * tn:3 * tn])
    outgate    = jnp.sigmoid(gates[:, 3 * tn:4 * tn]) if False else jax.nn.sigmoid(gates[:, 3 * tn:4 * tn])

    cx = cx_ref[...].astype(jnp.float32)
    cy = cx * forgetgate + ingate * cellgate
    hy = outgate * jnp.tanh(cy)

    cy_ref[...] = cy.astype(cy_ref.dtype)
    hy_ref[...] = hy.astype(hy_ref.dtype)


def pack_lstm_params(wx, wh, b, *, compute_dtype=jnp.bfloat16):
    """One-time (init-time) weight repack.  Call once, reuse every step.

    wx : (I, 4H)   wh : (H, 4H)   b : (1, 4H) or (4H,)   gate order [i|f|g|o]

    Fuses Wx/Wh along K, zero-pads to (Kp, 4*Hp), and interleaves gates per
    hidden tile so every gate slice in the kernel is lane-aligned and hy/cy
    stores are lane-dense:
        w_t[j, r, g*tn + t] == W_fused[r, g*H + j*tn + t]
    compute_dtype (bf16 by default) halves weight HBM traffic and doubles MXU
    throughput; accumulation and gate math remain f32 in the kernel.
    """
    I = wx.shape[0]
    H = wh.shape[0]
    K = I + H
    w_bytes = jnp.dtype(compute_dtype).itemsize

    # Contraction dim rounded to 128 (covers bf16/fp8 sublane packing too).
    Kp = _round_up(K, 128)

    # Hidden tile: prefer 256 when it divides H and the double-buffered weight
    # tile still fits comfortably in the VMEM budget (also v7x-64-MiB safe);
    # otherwise fall back to 128.
    tn = 256 if (H % 256 == 0 and 2 * Kp * 4 * 256 * w_bytes <= _VMEM_BUDGET // 2) else 128
    # TODO(synk): for very large K (weight tile > budget even at tn=128) add a
    # K grid axis ("arbitrary") with an f32 VMEM accumulator.
    # TODO(synk): v7x fp8 weight path (per-hidden-tile scale folded into the
    # gate math) would halve weight bytes again vs bf16.

    Hp = _round_up(H, tn)
    n_tiles = Hp // tn

    w_full = jnp.concatenate([wx, wh], axis=0)                      # (K, 4H)
    w4 = w_full.reshape(K, 4, H)
    w4 = jnp.pad(w4, ((0, Kp - K), (0, 0), (0, Hp - H)))
    w_t = (w4.reshape(Kp, 4, n_tiles, tn)
              .transpose(2, 0, 1, 3)
              .reshape(n_tiles, Kp, 4 * tn)).astype(compute_dtype)

    b4 = jnp.pad(jnp.reshape(b, (4, H)), ((0, 0), (0, Hp - H)))
    b_t = (b4.reshape(4, n_tiles, tn)
             .transpose(1, 0, 2)
             .reshape(n_tiles, 1, 4 * tn)).astype(jnp.float32)

    return {
        "w_t": w_t,
        "b_t": b_t,
        "input_size": I,
        "hidden_size": H,
        "K": K,
        "Kp": Kp,
        "tn": tn,
        "Hp": Hp,
        "n_tiles": n_tiles,
        "mm_dtype": jnp.dtype(compute_dtype),
    }


def lstm_cell(x, hx, cx, params):
    """Pallas LSTM cell step using packed params. Returns (hy, cy).

    x : (B, I)    hx, cx : (B, H)    params: output of pack_lstm_params().
    """
    B, I = x.shape
    H = params["hidden_size"]
    assert I == params["input_size"]
    assert hx.shape == (B, H) and cx.shape == (B, H)

    K = params["K"]
    Kp = params["Kp"]
    tn = params["tn"]
    Hp = params["Hp"]
    n_tiles = params["n_tiles"]
    mm_dtype = params["mm_dtype"]
    w_t, b_t = params["w_t"], params["b_t"]

    out_dtype = x.dtype
    mm_bytes = mm_dtype.itemsize
    out_bytes = jnp.dtype(out_dtype).itemsize

    # ---- Batch tile: fill the 256-wide MXU M side on large batches
    # (v6e/v7x), otherwise a lane/sublane-aligned tile <= 128; shrink if the
    # working set would not double-buffer within the VMEM budget. -----------
    tb = 256 if B >= 256 else min(128, _round_up(B, 8))

    def working_set(tb_):
        w = 2 * Kp * 4 * tn * mm_bytes            # weight tile, double-buffered
        xh_ = 2 * tb_ * Kp * mm_bytes             # xh tile, double-buffered
        io = 2 * 3 * tb_ * tn * out_bytes         # cx + hy + cy, double-buffered
        bias = 2 * 4 * tn * 4
        gates = tb_ * 4 * tn * 4                  # f32 gates intermediate
        return w + xh_ + io + bias + gates

    while working_set(tb) > _VMEM_BUDGET and tb > 8:
        tb = max(8, _round_up(tb // 2, 8))
    Bp = _round_up(B, tb)

    # ---- Activations: fuse [x | hx]; pad only when not already aligned ----
    xh = jnp.concatenate([x, hx], axis=1).astype(mm_dtype)
    if (Bp, Kp) != (B, K):
        xh = jnp.pad(xh, ((0, Bp - B), (0, Kp - K)))
    cx_p = cx if (Bp, Hp) == (B, H) else jnp.pad(cx, ((0, Bp - B), (0, Hp - H)))

    # Grid: hidden tiles OUTER, batch tiles INNER.  The weight/bias block
    # index is constant along the inner batch axis, so the [Wx;Wh] tile stays
    # VMEM-resident across consecutive batch tiles (no re-DMA); the leading
    # "parallel" axis shards hidden tiles across the two TCs on v7x.
    # TODO(synk): for sequence/decode workloads add a leading time axis
    # ("arbitrary") with a constant weight index_map so [Wx;Wh] is DMAed once
    # for all T steps, carrying h/c in f32 VMEM scratch.
    grid = (n_tiles, Bp // tb)

    cost = pl.CostEstimate(
        flops=2 * Bp * Kp * 4 * Hp + 10 * Bp * Hp,
        transcendentals=10 * Bp * Hp,
        bytes_accessed=(w_t.size * mm_bytes + b_t.size * 4
                        + n_tiles * xh.size * mm_bytes
                        + (cx_p.size + 2 * Bp * Hp) * out_bytes),
    )

    # Explicit scoped-VMEM limit sized from the working set (default is only
    # 16 MiB on v5e / 32 MiB on v6e/v7x); capped below v7x's 64 MiB physical.
    vmem_limit = max(32 * 1024 * 1024,
                     min(int(working_set(tb) * 1.3) + (1 << 20),
                         56 * 1024 * 1024))

    hy_p, cy_p = pl.pallas_call(
        lstm_cell_kernel,
        out_shape=(jax.ShapeDtypeStruct((Bp, Hp), out_dtype),   # hy
                   jax.ShapeDtypeStruct((Bp, Hp), out_dtype)),  # cy
        grid=grid,
        in_specs=[
            pl.BlockSpec((tb, Kp), lambda j, i: (i, 0)),            # xh
            pl.BlockSpec((tb, tn), lambda j, i: (i, j)),            # cx
            pl.BlockSpec((1, Kp, 4 * tn), lambda j, i: (j, 0, 0)),  # fused W (resident over i)
            pl.BlockSpec((1, 1, 4 * tn), lambda j, i: (j, 0, 0)),   # fused bias
        ],
        out_specs=(pl.BlockSpec((tb, tn), lambda j, i: (i, j)),
                   pl.BlockSpec((tb, tn), lambda j, i: (i, j))),
        compiler_params=pltpu.CompilerParams(
            dimension_semantics=("parallel", "parallel"),
            vmem_limit_bytes=vmem_limit),
        cost_estimate=cost,
    )(xh, cx_p, w_t, b_t)

    if (Bp, Hp) != (B, H):
        hy_p = hy_p[:B, :H]
        cy_p = cy_p[:B, :H]
    return hy_p, cy_p


def init_lstm_params(key, input_size, hidden_size, dtype=jnp.float32):
    """Mirror nn.Linear param shapes + reset_parameters (uniform(-std, std))."""
    std = 1.0 / math.sqrt(hidden_size)
    k1, k2, k3, k4 = jax.random.split(key, 4)
    # PyTorch nn.Linear weight is (out_features, in_features); keep the
    # transposed layout so the math is x @ Wx directly.
    wx = jax.random.uniform(k1, (4 * hidden_size, input_size), dtype, -std, std).T
    wh = jax.random.uniform(k2, (4 * hidden_size, hidden_size), dtype, -std, std).T
    bx = jax.random.uniform(k3, (4 * hidden_size,), dtype, -std, std)
    bh = jax.random.uniform(k4, (4 * hidden_size,), dtype, -std, std)
    b = (bx + bh).reshape(1, 4 * hidden_size)
    return wx, wh, b


def lstm_cell_ref(x, hx, cx, wx, wh, b):
    """Pure-JAX reference matching the PyTorch forward."""
    gates = x @ wx + hx @ wh + b
    H = hx.shape[1]
    i = jax.nn.sigmoid(gates[:, 0 * H:1 * H])
    f = jax.nn.sigmoid(gates[:, 1 * H:2 * H])
    g = jnp.tanh(gates[:, 2 * H:3 * H])
    o = jax.nn.sigmoid(gates[:, 3 * H:4 * H])
    cy = cx * f + i * g
    hy = o * jnp.tanh(cy)
    return hy, cy


if __name__ == "__main__":
    batch = 8
    input_size = 32
    hidden_size = 32

    key = jax.random.PRNGKey(0)
    kx, kh, kc, kp = jax.random.split(key, 4)

    x = jax.random.normal(kx, (batch, input_size), jnp.float32)
    hx = jax.random.normal(kh, (batch, hidden_size), jnp.float32)
    cx = jax.random.normal(kc, (batch, hidden_size), jnp.float32)
    wx, wh, b = init_lstm_params(kp, input_size, hidden_size)

    hy_ref, cy_ref = lstm_cell_ref(x, hx, cx, wx, wh, b)

    # f32-matmul path: matches the reference tightly.
    params_f32 = pack_lstm_params(wx, wh, b, compute_dtype=jnp.float32)
    hy, cy = lstm_cell(x, hx, cx, params_f32)
    jax.block_until_ready((hy, cy))
    assert hy.shape == (batch, hidden_size) and cy.shape == (batch, hidden_size)
    assert jnp.allclose(hy, hy_ref, atol=1e-5, rtol=1e-5)
    assert jnp.allclose(cy, cy_ref, atol=1e-5, rtol=1e-5)

    # Default bf16-matmul path (f32 accumulation + f32 gate math): looser tol.
    params_bf16 = pack_lstm_params(wx, wh, b)   # bf16 weights by default
    hy_bf, cy_bf = lstm_cell(x, hx, cx, params_bf16)
    jax.block_until_ready((hy_bf, cy_bf))
    assert float(jnp.max(jnp.abs(hy_bf - hy_ref))) < 0.15
    assert float(jnp.max(jnp.abs(cy_bf - cy_ref))) < 0.15

    print("KERNEL_OK")
</pallas_src>

<mosaic_0001>
module attributes {stable_mosaic.version = 11 : i64} {
  func.func @lstm_cell_kernel(%arg0: i32, %arg1: i32, %arg2: memref<8x128xf32, #tpu.memory_space<vmem>>, %arg3: memref<8x128xf32, #tpu.memory_space<vmem>>, %arg4: memref<1x128x512xf32, #tpu.memory_space<vmem>>, %arg5: memref<1x1x512xf32, #tpu.memory_space<vmem>>, %arg6: memref<8x128xf32, #tpu.memory_space<vmem>>, %arg7: memref<8x128xf32, #tpu.memory_space<vmem>>) attributes {dimension_semantics = [#tpu.dimension_semantics<parallel>, #tpu.dimension_semantics<parallel>], iteration_bounds = array<i64: 1, 1>, scalar_prefetch = 0 : i64, scratch_operands = 0 : i64, tpu.core_type = #tpu.core_type<tc>, window_params = [{transform_indices = @transform_0, window_bounds = array<i64: 8, 128>}, {transform_indices = @transform_1, window_bounds = array<i64: 8, 128>}, {transform_indices = @transform_2, window_bounds = array<i64: 1, 128, 512>}, {transform_indices = @transform_3, window_bounds = array<i64: 1, 1, 512>}, {transform_indices = @transform_4, window_bounds = array<i64: 8, 128>}, {transform_indices = @transform_5, window_bounds = array<i64: 8, 128>}]} {
    %c0 = arith.constant 0 : index
    %c0_0 = arith.constant 0 : index
    %0 = vector.load %arg2[%c0, %c0_0] : memref<8x128xf32, #tpu.memory_space<vmem>>, vector<8x128xf32>
    %c0_1 = arith.constant 0 : index
    %c0_2 = arith.constant 0 : index
    %c0_3 = arith.constant 0 : index
    %1 = vector.load %arg4[%c0_1, %c0_2, %c0_3] : memref<1x128x512xf32, #tpu.memory_space<vmem>>, vector<1x128x512xf32>
    %2 = vector.shape_cast %1 : vector<1x128x512xf32> to vector<128x512xf32>
    %cst = arith.constant dense<0.000000e+00> : vector<8x512xf32>
    %3 = tpu.matmul %0, %2, %cst {dimension_numbers = #tpu.dot_dimension_numbers<[1], [0], [0], [1], [0, 0, 1, 1], [], []>} : vector<8x128xf32>, vector<128x512xf32>, vector<8x512xf32> -> vector<8x512xf32>
    %c0_4 = arith.constant 0 : index
    %c0_5 = arith.constant 0 : index
    %c0_6 = arith.constant 0 : index
    %4 = vector.load %arg5[%c0_4, %c0_5, %c0_6] : memref<1x1x512xf32, #tpu.memory_space<vmem>>, vector<1x1x512xf32>
    %5 = vector.shape_cast %4 : vector<1x1x512xf32> to vector<1x512xf32>
    %6 = vector.broadcast %5 : vector<1x512xf32> to vector<8x512xf32>
    %7 = arith.addf %3, %6 : vector<8x512xf32>
    %8 = vector.extract_strided_slice %7 {offsets = [0, 0], sizes = [8, 128], strides = [1, 1]} : vector<8x512xf32> to vector<8x128xf32>
    %9 = arith.negf %8 : vector<8x128xf32>
    %10 = math.exp %9 : vector<8x128xf32>
    %cst_7 = arith.constant 1.000000e+00 : f32
    %11 = vector.broadcast %cst_7 : f32 to vector<8x128xf32>
    %12 = arith.addf %11, %10 : vector<8x128xf32>
    %13 = arith.divf %11, %12 : vector<8x128xf32>
    %14 = vector.extract_strided_slice %7 {offsets = [0, 128], sizes = [8, 128], strides = [1, 1]} : vector<8x512xf32> to vector<8x128xf32>
    %15 = arith.negf %14 : vector<8x128xf32>
    %16 = math.exp %15 : vector<8x128xf32>
    %cst_8 = arith.constant 1.000000e+00 : f32
    %17 = vector.broadcast %cst_8 : f32 to vector<8x128xf32>
    %18 = arith.addf %17, %16 : vector<8x128xf32>
    %19 = arith.divf %17, %18 : vector<8x128xf32>
    %20 = vector.extract_strided_slice %7 {offsets = [0, 256], sizes = [8, 128], strides = [1, 1]} : vector<8x512xf32> to vector<8x128xf32>
    %21 = math.tanh %20 : vector<8x128xf32>
    %22 = vector.extract_strided_slice %7 {offsets = [0, 384], sizes = [8, 128], strides = [1, 1]} : vector<8x512xf32> to vector<8x128xf32>
    %23 = arith.negf %22 : vector<8x128xf32>
    %24 = math.exp %23 : vector<8x128xf32>
    %cst_9 = arith.constant 1.000000e+00 : f32
    %25 = vector.broadcast %cst_9 : f32 to vector<8x128xf32>
    %26 = arith.addf %25, %24 : vector<8x128xf32>
    %27 = arith.divf %25, %26 : vector<8x128xf32>
    %c0_10 = arith.constant 0 : index
    %c0_11 = arith.constant 0 : index
    %28 = vector.load %arg3[%c0_10, %c0_11] : memref<8x128xf32, #tpu.memory_space<vmem>>, vector<8x128xf32>
    %29 = arith.mulf %28, %19 : vector<8x128xf32>
    %30 = arith.mulf %13, %21 : vector<8x128xf32>
    %31 = arith.addf %29, %30 : vector<8x128xf32>
    %32 = math.tanh %31 : vector<8x128xf32>
    %33 = arith.mulf %27, %32 : vector<8x128xf32>
    %c0_12 = arith.constant 0 : index
    %c0_13 = arith.constant 0 : index
    %34 = vector.load %arg7[%c0_12, %c0_13] : memref<8x128xf32, #tpu.memory_space<vmem>>, vector<8x128xf32>
    tpu.vector_store %arg7[%c0_12, %c0_13], %31 {strides = array<i32>} : memref<8x128xf32, #tpu.memory_space<vmem>>, vector<8x128xf32>,
    %c0_14 = arith.constant 0 : index
    %c0_15 = arith.constant 0 : index
    %35 = vector.load %arg6[%c0_14, %c0_15] : memref<8x128xf32, #tpu.memory_space<vmem>>, vector<8x128xf32>
    tpu.vector_store %arg6[%c0_14, %c0_15], %33 {strides = array<i32>} : memref<8x128xf32, #tpu.memory_space<vmem>>, vector<8x128xf32>,
    return
  }
  func.func @transform_0(%arg0: i32, %arg1: i32) -> (i32, i32) {
    %c0_i32 = arith.constant 0 : i32
    %c0_i32_0 = arith.constant 0 : i32
    return %arg1, %c0_i32 : i32, i32
  }
  func.func @transform_1(%arg0: i32, %arg1: i32) -> (i32, i32) {
    %c0_i32 = arith.constant 0 : i32
    return %arg1, %arg0 : i32, i32
  }
  func.func @transform_2(%arg0: i32, %arg1: i32) -> (i32, i32, i32) {
    %c0_i32 = arith.constant 0 : i32
    %c0_i32_0 = arith.constant 0 : i32
    %c0_i32_1 = arith.constant 0 : i32
    return %arg0, %c0_i32, %c0_i32_0 : i32, i32, i32
  }
  func.func @transform_3(%arg0: i32, %arg1: i32) -> (i32, i32, i32) {
    %c0_i32 = arith.constant 0 : i32
    %c0_i32_0 = arith.constant 0 : i32
    %c0_i32_1 = arith.constant 0 : i32
    return %arg0, %c0_i32, %c0_i32_0 : i32, i32, i32
  }
  func.func @transform_4(%arg0: i32, %arg1: i32) -> (i32, i32) {
    %c0_i32 = arith.constant 0 : i32
    return %arg1, %arg0 : i32, i32
  }
  func.func @transform_5(%arg0: i32, %arg1: i32) -> (i32, i32) {
    %c0_i32 = arith.constant 0 : i32
    return %arg1, %arg0 : i32, i32
  }
}

</mosaic_0001>

<llo_original>
// kernel: tpu_custom_call.1
$region0: #{tpu_custom_call.1}
  #allocation0 [shape = 'u32[]', space=smem, size = 0x4, offset = 0x4, fixed_abs, tag = 'smem constant byte address 0x4 - core index']
  #allocation1 [shape = 'u32[144,128]{1,0:T(1,128)}', space=vmem, size = 0x12000, scoped, tag = 'internal scratch']
  %s0 = inlined_call_operand.hbm [shape: f32[8,128], index: 0, kind: input, shape index: {}]
  %s1 = inlined_call_operand.hbm [shape: f32[8,128], index: 1, kind: input, shape index: {}]
  %s2 = inlined_call_operand.hbm [shape: f32[1,128,512], index: 2, kind: input, shape index: {}]
  %s3 = inlined_call_operand.vmem [shape: f32[1,1,512], index: 3, kind: input, shape index: {}]
  %s4 = inlined_call_operand.hbm [shape: f32[8,128], index: 4, kind: output, shape index: {0}]
  %s5 = inlined_call_operand.hbm [shape: f32[8,128], index: 5, kind: output, shape index: {1}]
  %6 = xla_tuple %s4, %s5
  %s7 = sld [smem:[#allocation0]]
  $region46: #{tpu_custom_call.1} parent=0
    _
  %s9 = ssub.s32 1, %s7
  %s10 = scalar_select 0, %s9, %s7
  $region1: #{tpu_custom_call.1} parent=0
    #allocation2 [shape = 'u8[4096]{0}', space=vmem, size = 0x1000, scoped, tag = 'input window, operand 0, single buffered']
    #allocation3 [shape = 's32[1]{0}', space=sflag, size = 0x4, scoped, tag = 'scoped memory for tpu_custom_call.1']
    #allocation4 [shape = 's32[1]{0}', space=sflag, size = 0x4, scoped, tag = 'scoped memory for tpu_custom_call.1']
    #allocation5 [shape = 'u8[4096]{0}', space=vmem, size = 0x1000, scoped, tag = 'input window, operand 1, single buffered']
    #allocation6 [shape = 's32[1]{0}', space=sflag, size = 0x4, scoped, tag = 'scoped memory for tpu_custom_call.1']
    #allocation7 [shape = 'u8[262144]{0}', space=vmem, size = 0x40000, scoped, tag = 'input window, operand 2, single buffered']
    #allocation8 [shape = 'u8[4096]{0}', space=vmem, size = 0x1000, scoped, tag = 'output window, operand 0, single buffered']
    #allocation9 [shape = 'u8[4096]{0}', space=vmem, size = 0x1000, scoped, tag = 'output window, operand 1, single buffered']
    #allocation10 [shape = 's32[1]{0}', space=sflag, size = 0x4, scoped, tag = 'scoped memory for tpu_custom_call.1']
    %11 = vsyncpa [#allocation3], 0
    %12 = vsyncpa [#allocation6], 0
    %13 = vsyncpa [#allocation4], 0
    %14 = vsyncpa [#allocation10], 0
    // Predicated region
    $region2: #{tpu_custom_call.1} parent=1 // pred_check
      _
    $region3: #{tpu_custom_call.1} parent=1 // pred_check_branch
      %16 = sbr.rel (0) target = $region5
    $region4: #{tpu_custom_call.1} parent=1 // pred_region
      %s18 = ssub.s32 128, 128
      %19 = vsyncadd [#allocation3], %s18
      %s21 = sshll.u32 [#allocation2], 4
      %s22 = int_to_ptr.vmem [resolvable:$true] %s21
      %24 = dma.hbm_to_vmem [thread:$0]  %s0, 128, %s22, [#allocation3]
    $region5: #{tpu_custom_call.1} parent=1 // pred_fallthru
      _
    // Predicated region
    $region6: #{tpu_custom_call.1} parent=1 // pred_check
      _
    $region7: #{tpu_custom_call.1} parent=1 // pred_check_branch
      %26 = sbr.rel (0) target = $region9
    $region8: #{tpu_custom_call.1} parent=1 // pred_region
      %s28 = ssub.s32 128, 128
      %29 = vsyncadd [#allocation6], %s28
      %s31 = sshll.u32 [#allocation5], 4
      %s32 = int_to_ptr.vmem [resolvable:$true] %s31
      %34 = dma.hbm_to_vmem [thread:$0]  %s1, 128, %s32, [#allocation6]
    $region9: #{tpu_custom_call.1} parent=1 // pred_fallthru
      _
    // Predicated region
    $region10: #{tpu_custom_call.1} parent=1 // pred_check
      _
    $region11: #{tpu_custom_call.1} parent=1 // pred_check_branch
      %36 = sbr.rel (0) target = $region13
    $region12: #{tpu_custom_call.1} parent=1 // pred_region
      %s38 = ssub.s32 8192, 8192
      %39 = vsyncadd [#allocation6], %s38
      %s40 = sshll.u32 [#allocation7], 4
      %s41 = int_to_ptr.vmem [resolvable:$true] %s40
      %46 = dma.hbm_to_vmem [thread:$0]  %s2, 8192, %s41, [#allocation6], 512, 512, 32
    $region13: #{tpu_custom_call.1} parent=1 // pred_fallthru
      _
    // Predicated region
    $region14: #{tpu_custom_call.1} parent=1 // pred_check
      _
    $region15: #{tpu_custom_call.1} parent=1 // pred_check_branch
      %48 = sbr.rel (0) target = $region17
    $region16: #{tpu_custom_call.1} parent=1 // pred_region
      _
    $region17: #{tpu_custom_call.1} parent=1 // pred_fallthru
      _
    // Predicated region
    $region18: #{tpu_custom_call.1} parent=1 // pred_check
      _
    $region19: #{tpu_custom_call.1} parent=1 // pred_check_branch
      %50 = sbr.rel (0) target = $region21
    $region20: #{tpu_custom_call.1} parent=1 // pred_region
      %51 = dma.done [#allocation3], 128
    $region21: #{tpu_custom_call.1} parent=1 // pred_fallthru
      _
    // Predicated region
    $region22: #{tpu_custom_call.1} parent=1 // pred_check
      _
    $region23: #{tpu_custom_call.1} parent=1 // pred_check_branch
      %53 = sbr.rel (0) target = $region25
    $region24: #{tpu_custom_call.1} parent=1 // pred_region
      %54 = dma.done [#allocation6], 128
    $region25: #{tpu_custom_call.1} parent=1 // pred_fallthru
      _
    // Predicated region
    $region26: #{tpu_custom_call.1} parent=1 // pred_check
      _
    $region27: #{tpu_custom_call.1} parent=1 // pred_check_branch
      %56 = sbr.rel (0) target = $region29
    $region28: #{tpu_custom_call.1} parent=1 // pred_region
      %57 = dma.done [#allocation6], 8192
    $region29: #{tpu_custom_call.1} parent=1 // pred_fallthru
      _
    %v58 = vld [vmem:[#allocation2] sm:$0xff]
    %v59 = vld [vmem:[#allocation7] sm:$0xff]
    %v60 = vld [vmem:[#allocation7 + $0x8] sm:$0xff]
    %v61 = vld [vmem:[#allocation7 + $0x10] sm:$0xff]
    %v62 = vld [vmem:[#allocation7 + $0x18] sm:$0xff]
    %v63 = vld [vmem:[#allocation7 + $0x20] sm:$0xff]
    %v64 = vld [vmem:[#allocation7 + $0x28] sm:$0xff]
    %v65 = vld [vmem:[#allocation7 + $0x30] sm:$0xff]
    %v66 = vld [vmem:[#allocation7 + $0x38] sm:$0xff]
    %v67 = vld [vmem:[#allocation7 + $0x40] sm:$0xff]
    %v68 = vld [vmem:[#allocation7 + $0x48] sm:$0xff]
    %v69 = vld [vmem:[#allocation7 + $0x50] sm:$0xff]
    %v70 = vld [vmem:[#allocation7 + $0x58] sm:$0xff]
    %v71 = vld [vmem:[#allocation7 + $0x60] sm:$0xff]
    %v72 = vld [vmem:[#allocation7 + $0x68] sm:$0xff]
    %v73 = vld [vmem:[#allocation7 + $0x70] sm:$0xff]
    %v74 = vld [vmem:[#allocation7 + $0x78] sm:$0xff]
    %v75 = vld [vmem:[#allocation7 + $0x80] sm:$0xff]
    %v76 = vld [vmem:[#allocation7 + $0x88] sm:$0xff]
    %v77 = vld [vmem:[#allocation7 + $0x90] sm:$0xff]
    %v78 = vld [vmem:[#allocation7 + $0x98] sm:$0xff]
    %v79 = vld [vmem:[#allocation7 + $0xa0] sm:$0xff]
    %v80 = vld [vmem:[#allocation7 + $0xa8] sm:$0xff]
    %v81 = vld [vmem:[#allocation7 + $0xb0] sm:$0xff]
    %v82 = vld [vmem:[#allocation7 + $0xb8] sm:$0xff]
    %v83 = vld [vmem:[#allocation7 + $0xc0] sm:$0xff]
    %v84 = vld [vmem:[#allocation7 + $0xc8] sm:$0xff]
    %v85 = vld [vmem:[#allocation7 + $0xd0] sm:$0xff]
    %v86 = vld [vmem:[#allocation7 + $0xd8] sm:$0xff]
    %v87 = vld [vmem:[#allocation7 + $0xe0] sm:$0xff]
    %v88 = vld [vmem:[#allocation7 + $0xe8] sm:$0xff]
    %v89 = vld [vmem:[#allocation7 + $0xf0] sm:$0xff]
    %v90 = vld [vmem:[#allocation7 + $0xf8] sm:$0xff]
    %v91 = vld [vmem:[#allocation7 + $0x100] sm:$0xff]
    %v92 = vld [vmem:[#allocation7 + $0x108] sm:$0xff]
    %v93 = vld [vmem:[#allocation7 + $0x110] sm:$0xff]
    %v94 = vld [vmem:[#allocation7 + $0x118] sm:$0xff]
    %v95 = vld [vmem:[#allocation7 + $0x120] sm:$0xff]
    %v96 = vld [vmem:[#allocation7 + $0x128] sm:$0xff]
    %v97 = vld [vmem:[#allocation7 + $0x130] sm:$0xff]
    %v98 = vld [vmem:[#allocation7 + $0x138] sm:$0xff]
    %v99 = vld [vmem:[#allocation7 + $0x140] sm:$0xff]
    %v100 = vld [vmem:[#allocation7 + $0x148] sm:$0xff]
    %v101 = vld [vmem:[#allocation7 + $0x150] sm:$0xff]
    %v102 = vld [vmem:[#allocation7 + $0x158] sm:$0xff]
    %v103 = vld [vmem:[#allocation7 + $0x160] sm:$0xff]
    %v104 = vld [vmem:[#allocation7 + $0x168] sm:$0xff]
    %v105 = vld [vmem:[#allocation7 + $0x170] sm:$0xff]
    %v106 = vld [vmem:[#allocation7 + $0x178] sm:$0xff]
    %v107 = vld [vmem:[#allocation7 + $0x180] sm:$0xff]
    %v108 = vld [vmem:[#allocation7 + $0x188] sm:$0xff]
    %v109 = vld [vmem:[#allocation7 + $0x190] sm:$0xff]
    %v110 = vld [vmem:[#allocation7 + $0x198] sm:$0xff]
    %v111 = vld [vmem:[#allocation7 + $0x1a0] sm:$0xff]
    %v112 = vld [vmem:[#allocation7 + $0x1a8] sm:$0xff]
    %v113 = vld [vmem:[#allocation7 + $0x1b0] sm:$0xff]
    %v114 = vld [vmem:[#allocation7 + $0x1b8] sm:$0xff]
    %v115 = vld [vmem:[#allocation7 + $0x1c0] sm:$0xff]
    %v116 = vld [vmem:[#allocation7 + $0x1c8] sm:$0xff]
    %v117 = vld [vmem:[#allocation7 + $0x1d0] sm:$0xff]
    %v118 = vld [vmem:[#allocation7 + $0x1d8] sm:$0xff]
    %v119 = vld [vmem:[#allocation7 + $0x1e0] sm:$0xff]
    %v120 = vld [vmem:[#allocation7 + $0x1e8] sm:$0xff]
    %v121 = vld [vmem:[#allocation7 + $0x1f0] sm:$0xff]
    %v122 = vld [vmem:[#allocation7 + $0x1f8] sm:$0xff]
    %v123 = vld [vmem:[%s3] sm:$0xf]
    %v125 = vlaneseq
    %v126 = vshrl.u32 %v125, 7
    %v127 = vsub.s32 0, %v126
    %v128 = vrot.slane %v123, %v127
    %v129 = vlaneseq
    %v130 = vshrl.u32 %v129, 7
    %v131 = vsub.s32 1, %v130
    %v132 = vrot.slane %v123, %v131
    %v133 = vlaneseq
    %v134 = vshrl.u32 %v133, 7
    %v135 = vsub.s32 2, %v134
    %v136 = vrot.slane %v123, %v135
    %v137 = vlaneseq
    %v138 = vshrl.u32 %v137, 7
    %v139 = vsub.s32 3, %v138
    %v140 = vrot.slane %v123, %v139
    %145 = vmatprep.subr.mxu0 %v60
    %146 = vmatpush1.msra.mxu0 %v59
    %147 = vmatprep.subr.mxu0 %v64
    %148 = vmatpush1.msra.mxu0 %v63
    %149 = vmatprep.subr.mxu0 %v68
    %150 = vmatpush1.msra.mxu0 %v67
    %151 = vmatprep.subr.mxu0 %v72
    %152 = vmatpush1.msra.mxu0 %v71
    %153 = vmatprep.subr.mxu0 %v76
    %154 = vmatpush1.msra.mxu0 %v75
    %155 = vmatprep.subr.mxu0 %v80
    %156 = vmatpush1.msra.mxu0 %v79
    %157 = vmatprep.subr.mxu0 %v84
    %158 = vmatpush1.msra.mxu0 %v83
    %159 = vmatprep.subr.mxu0 %v88
    %160 = vmatpush1.msra.mxu0 %v87
    %161 = vmatprep.subr.mxu0 %v92
    %162 = vmatpush1.msra.mxu0 %v91
    %163 = vmatprep.subr.mxu0 %v96
    %164 = vmatpush1.msra.mxu0 %v95
    %165 = vmatprep.subr.mxu0 %v100
    %166 = vmatpush1.msra.mxu0 %v99
    %167 = vmatprep.subr.mxu0 %v104
    %168 = vmatpush1.msra.mxu0 %v103
    %169 = vmatprep.subr.mxu0 %v108
    %170 = vmatpush1.msra.mxu0 %v107
    %171 = vmatprep.subr.mxu0 %v112
    %172 = vmatpush1.msra.mxu0 %v111
    %173 = vmatprep.subr.mxu0 %v116
    %174 = vmatpush1.msra.mxu0 %v115
    %175 = vmatprep.subr.mxu0 %v120
    %176 = vmatpush1.msra.mxu0 %v119
    %177 = vmatprep.subr.mxu0 0.0
    %178 = vmatpush1.msra.mxu0 0.0
    %179 = vmatprep.subr.mxu0 0.0
    %180 = vmatpush1.msra.mxu0 0.0
    %181 = vmatprep.subr.mxu0 0.0
    %182 = vmatpush1.msra.mxu0 0.0
    %183 = vmatprep.subr.mxu0 0.0
    %184 = vmatpush1.msra.mxu0 0.0
    %185 = vmatprep.subr.mxu0 0.0
    %186 = vmatpush1.msra.mxu0 0.0
    %187 = vmatprep.subr.mxu0 0.0
    %188 = vmatpush1.msra.mxu0 0.0
    %189 = vmatprep.subr.mxu0 0.0
    %190 = vmatpush1.msra.mxu0 0.0
    %191 = vmatprep.subr.mxu0 0.0
    %192 = vmatpush1.msra.mxu0 0.0
    %193 = vmatprep.subr.mxu0 0.0
    %194 = vmatpush1.msra.mxu0 0.0
    %195 = vmatprep.subr.mxu0 0.0
    %196 = vmatpush1.msra.mxu0 0.0
    %197 = vmatprep.subr.mxu0 0.0
    %198 = vmatpush1.msra.mxu0 0.0
    %199 = vmatprep.subr.mxu0 0.0
    %200 = vmatpush1.msra.mxu0 0.0
    %201 = vmatprep.subr.mxu0 0.0
    %202 = vmatpush1.msra.mxu0 0.0
    %203 = vmatprep.subr.mxu0 0.0
    %204 = vmatpush1.msra.mxu0 0.0
    %205 = vmatprep.subr.mxu0 0.0
    %206 = vmatpush1.msra.mxu0 0.0
    %207 = vmatprep.subr.mxu0 0.0
    %208 = vmatpush1.msra.mxu0 0.0
    %209 = vmatprep.mubr.f32.mxu0 0.0
    %210 = vmatmul.mubr.f32.gmra.mrb[0].mxu0 %v58
    %v211 = vpop.f32.mrb[0].mxu0
    %v212 = vadd.f32 %v128, %v211
    %v213 = vpop.f32.mrb[0].mxu0
    %v214 = vadd.f32 %v132, %v213
    %215 = vdwg.mxu0
    %216 = vmatprep.subr.mxu0 %v62
    %217 = vmatpush1.msra.mxu0 %v61
    %218 = vmatprep.subr.mxu0 %v66
    %219 = vmatpush1.msra.mxu0 %v65
    %220 = vmatprep.subr.mxu0 %v70
    %221 = vmatpush1.msra.mxu0 %v69
    %222 = vmatprep.subr.mxu0 %v74
    %223 = vmatpush1.msra.mxu0 %v73
    %224 = vmatprep.subr.mxu0 %v78
    %225 = vmatpush1.msra.mxu0 %v77
    %226 = vmatprep.subr.mxu0 %v82
    %227 = vmatpush1.msra.mxu0 %v81
    %228 = vmatprep.subr.mxu0 %v86
    %229 = vmatpush1.msra.mxu0 %v85
    %230 = vmatprep.subr.mxu0 %v90
    %231 = vmatpush1.msra.mxu0 %v89
    %232 = vmatprep.subr.mxu0 %v94
    %233 = vmatpush1.msra.mxu0 %v93
    %234 = vmatprep.subr.mxu0 %v98
    %235 = vmatpush1.msra.mxu0 %v97
    %236 = vmatprep.subr.mxu0 %v102
    %237 = vmatpush1.msra.mxu0 %v101
    %238 = vmatprep.subr.mxu0 %v106
    %239 = vmatpush1.msra.mxu0 %v105
    %240 = vmatprep.subr.mxu0 %v110
    %241 = vmatpush1.msra.mxu0 %v109
    %242 = vmatprep.subr.mxu0 %v114
    %243 = vmatpush1.msra.mxu0 %v113
    %244 = vmatprep.subr.mxu0 %v118
    %245 = vmatpush1.msra.mxu0 %v117
    %246 = vmatprep.subr.mxu0 %v122
    %247 = vmatpush1.msra.mxu0 %v121
    %248 = vmatprep.subr.mxu0 0.0
    %249 = vmatpush1.msra.mxu0 0.0
    %250 = vmatprep.subr.mxu0 0.0
    %251 = vmatpush1.msra.mxu0 0.0
    %252 = vmatprep.subr.mxu0 0.0
    %253 = vmatpush1.msra.mxu0 0.0
    %254 = vmatprep.subr.mxu0 0.0
    %255 = vmatpush1.msra.mxu0 0.0
    %256 = vmatprep.subr.mxu0 0.0
    %257 = vmatpush1.msra.mxu0 0.0
    %258 = vmatprep.subr.mxu0 0.0
    %259 = vmatpush1.msra.mxu0 0.0
    %260 = vmatprep.subr.mxu0 0.0
    %261 = vmatpush1.msra.mxu0 0.0
    %262 = vmatprep.subr.mxu0 0.0
    %263 = vmatpush1.msra.mxu0 0.0
    %264 = vmatprep.subr.mxu0 0.0
    %265 = vmatpush1.msra.mxu0 0.0
    %266 = vmatprep.subr.mxu0 0.0
    %267 = vmatpush1.msra.mxu0 0.0
    %268 = vmatprep.subr.mxu0 0.0
    %269 = vmatpush1.msra.mxu0 0.0
    %270 = vmatprep.subr.mxu0 0.0
    %271 = vmatpush1.msra.mxu0 0.0
    %272 = vmatprep.subr.mxu0 0.0
    %273 = vmatpush1.msra.mxu0 0.0
    %274 = vmatprep.subr.mxu0 0.0
    %275 = vmatpush1.msra.mxu0 0.0
    %276 = vmatprep.subr.mxu0 0.0
    %277 = vmatpush1.msra.mxu0 0.0
    %278 = vmatprep.subr.mxu0 0.0
    %279 = vmatpush1.msra.mxu0 0.0
    %280 = vmatprep.mubr.f32.mxu0 0.0
    %281 = vmatmul.mubr.f32.gmra.mrb[0].mxu0 %v58
    %v282 = vpop.f32.mrb[0].mxu0
    %v283 = vadd.f32 %v136, %v282
    %v284 = vpop.f32.mrb[0].mxu0
    %v285 = vadd.f32 %v140, %v284
    %286 = vdwg.mxu0
    %v287 = vxor.u32 %v212, 2147483648
    %v288 = vmul.f32 %v287, 1.442695
    %v289 = vpow.pop %v288
    %v290 = vadd.f32 %v289, 1.0
    %v291 = vrcp.pop %v290
    %v292 = vmul.f32 1.0, %v291
    %v293 = vxor.u32 %v214, 2147483648
    %v294 = vmul.f32 %v293, 1.442695
    %v295 = vpow.pop %v294
    %v296 = vadd.f32 %v295, 1.0
    %v297 = vrcp.pop %v296
    %v298 = vmul.f32 1.0, %v297
    %v299 = vtanh.pop %v283
    %v300 = vxor.u32 %v285, 2147483648
    %v301 = vmul.f32 %v300, 1.442695
    %v302 = vpow.pop %v301
    %v303 = vadd.f32 %v302, 1.0
    %v304 = vrcp.pop %v303
    %v305 = vmul.f32 1.0, %v304
    %v306 = vld [vmem:[#allocation5] sm:$0xff]
    %v307 = vmul.f32 %v306, %v298
    %v308 = vmul.f32 %v292, %v299
    %v309 = vadd.f32 %v307, %v308
    %v310 = vtanh.pop %v309
    %v311 = vmul.f32 %v305, %v310
    %312 = vst [vmem:[#allocation9] sm:$0xff] %v309
    %313 = vst [vmem:[#allocation8] sm:$0xff] %v311
    // Predicated region
    $region30: #{tpu_custom_call.1} parent=1 // pred_check
      _
    $region31: #{tpu_custom_call.1} parent=1 // pred_check_branch
      %315 = sbr.rel (0) target = $region33
    $region32: #{tpu_custom_call.1} parent=1 // pred_region
      %s317 = ssub.s32 128, 128
      %318 = vsyncadd [#allocation4], %s317
      %s320 = sshll.u32 [#allocation8], 4
      %s321 = int_to_ptr.vmem [resolvable:$true] %s320
      %323 = dma.vmem_to_hbm [thread:$0]  %s321, 128, %s4, [#allocation4]
    $region33: #{tpu_custom_call.1} parent=1 // pred_fallthru
      _
    // Predicated region
    $region34: #{tpu_custom_call.1} parent=1 // pred_check
      _
    $region35: #{tpu_custom_call.1} parent=1 // pred_check_branch
      %325 = sbr.rel (0) target = $region37
    $region36: #{tpu_custom_call.1} parent=1 // pred_region
      %s327 = ssub.s32 128, 128
      %328 = vsyncadd [#allocation10], %s327
      %s330 = sshll.u32 [#allocation9], 4
      %s331 = int_to_ptr.vmem [resolvable:$true] %s330
      %333 = dma.vmem_to_hbm [thread:$0]  %s331, 128, %s5, [#allocation10]
    $region37: #{tpu_custom_call.1} parent=1 // pred_fallthru
      _
    // Predicated region
    $region38: #{tpu_custom_call.1} parent=1 // pred_check
      _
    $region39: #{tpu_custom_call.1} parent=1 // pred_check_branch
      %335 = sbr.rel (0) target = $region41
    $region40: #{tpu_custom_call.1} parent=1 // pred_region
      %336 = dma.done [#allocation4], 128
    $region41: #{tpu_custom_call.1} parent=1 // pred_fallthru
      _
    // Predicated region
    $region42: #{tpu_custom_call.1} parent=1 // pred_check
      _
    $region43: #{tpu_custom_call.1} parent=1 // pred_check_branch
      %338 = sbr.rel (0) target = $region45
    $region44: #{tpu_custom_call.1} parent=1 // pred_region
      %339 = dma.done [#allocation10], 128
    $region45: #{tpu_custom_call.1} parent=1 // pred_fallthru
      _
    %340 = vsyncpa [#allocation3], 1
    %341 = vsyncpa [#allocation6], 1
    %342 = vsyncpa [#allocation4], 1
    %343 = vsyncpa [#allocation10], 1

</llo_original>
